<compile_context>
chip_gen: v7x
topology: tpu7x:2x2x1
jax: 0.10.0
libtpu: 0.0.40
codegen_flags: <defaults>
</compile_context>

<pallas_src>
import jax
import jax.numpy as jnp
from jax import lax
from jax.experimental import pallas as pl
from jax.experimental.pallas import tpu as pltpu


def _round_up(x, m):
    return ((x + m - 1) // m) * m


def _pick_tile(total, cap):
    """Largest multiple of 128 dividing `total` (itself a multiple of 128), capped at `cap`."""
    t = max(128, (min(cap, total) // 128) * 128)
    while total % t != 0:
        t -= 128
    return t


def r2e_transport(source_feat, target_feat, transport_matrix, params,
                  compute_dtype=jnp.float32, *,
                  max_full_n=1024, block_m=512, block_k=2048, mlp_chunk=512):
    """source_feat, target_feat: (B, N, H); transport_matrix: (B, N, N) -> (B, N, H)."""
    B, N, H = source_feat.shape
    w1a, w1b, b1, w2, b2 = params          # (H,H), (H,H), (1,H), (H,H), (1,H)
    cd = compute_dtype
    f32 = jnp.float32

    Hp = _round_up(H, 128)                 # lane-dense hidden dim for y / output stores
    Hc = 2 * H                             # concat feature dim (kept natural width)

    # Fold the concat: cat([s, t], -1) @ W1^T == (s || t) @ [W1a; W1b]  -> one K=2H dot.
    xcat = jnp.concatenate([source_feat, target_feat], axis=-1).astype(cd)   # (B, N, 2H)
    w1 = jnp.concatenate([w1a, w1b], axis=0)                                 # (2H, H)

    def pad2(a, r, c):
        return jnp.pad(a, ((0, r - a.shape[0]), (0, c - a.shape[1])))

    w1_p = pad2(w1, Hc, Hp).astype(cd)     # (2H, Hp)  (weights are tiny; zero-pad cols)
    w2_p = pad2(w2, Hp, Hp).astype(cd)     # (Hp, Hp)
    b1_p = pad2(b1, 1, Hp).astype(f32)
    b2_p = pad2(b2, 1, Hp).astype(f32)

    # ----- tiling of the transport matmul -----
    if N <= max_full_n:
        # Full per-batch blocks: no padding, no host copy of transport_matrix at all.
        Np, TM, TK = N, N, N
        chunk = N                          # MLP done in one shot per batch
    else:
        Np = _round_up(N, 128)             # pad to 128, never 512 (<= ~15% waste)
        TM = _pick_tile(Np, min(block_m, Np))
        TK = _pick_tile(Np, min(block_k, Np))
        chunk = _pick_tile(Np, min(mlp_chunk, Np))

    tm = transport_matrix                  # native dtype; cast (if any) happens in-kernel
    if Np != N:
        # TODO(synk): in-kernel ragged-tail masking would avoid this host pad for N % 128 != 0.
        xcat = jnp.pad(xcat, ((0, 0), (0, Np - N), (0, 0)))
        tm = jnp.pad(tm, ((0, 0), (0, Np - N), (0, Np - N)))

    n_m = Np // TM
    n_k = Np // TK
    n_chunks = Np // chunk
    cast_tm = jnp.dtype(cd) != jnp.dtype(tm.dtype)

    def kernel(tm_ref, x_ref, w1_ref, b1_ref, w2_ref, b2_ref, out_ref, y_ref, acc_ref):
        m = pl.program_id(1)
        k = pl.program_id(2)

        # --- once per batch: fused MLP for every row of this batch into VMEM y_ref ---
        @pl.when((m == 0) & (k == 0))
        def _():
            def body(c, carry):
                r = c * chunk
                if not isinstance(r, int) and chunk % 128 == 0:
                    r = pl.multiple_of(r, 128)
                x = x_ref[0, pl.ds(r, chunk), :]                               # (chunk, 2H)
                h = jnp.dot(x, w1_ref[...], preferred_element_type=jnp.float32) + b1_ref[...]
                h = jnp.maximum(h, 0.0).astype(w2_ref.dtype)
                y = jnp.dot(h, w2_ref[...], preferred_element_type=jnp.float32) + b2_ref[...]
                y_ref[pl.ds(r, chunk), :] = y.astype(y_ref.dtype)
                return carry

            if n_chunks == 1:
                body(0, 0)
            else:
                lax.fori_loop(0, n_chunks, body, 0, unroll=n_chunks <= 4)

        # --- tiled transport matmul with f32 VMEM accumulator (K axis last, "arbitrary") ---
        @pl.when(k == 0)
        def _():
            acc_ref[...] = jnp.zeros_like(acc_ref)

        tm_tile = tm_ref[0]
        if cast_tm:
            tm_tile = tm_tile.astype(cd)        # cast the tile in-kernel; HBM stays native
        ks = k * TK
        if TK % 128 == 0:
            ks = pl.multiple_of(ks, 128)
        y_tile = y_ref[pl.ds(ks, TK), :]
        acc_ref[...] += jnp.dot(tm_tile, y_tile, preferred_element_type=jnp.float32)

        @pl.when(k == pl.num_programs(2) - 1)
        def _():
            out_ref[0] = acc_ref[...].astype(out_ref.dtype)

    cd_b = jnp.dtype(cd).itemsize
    tm_b = jnp.dtype(tm.dtype).itemsize
    cost = pl.CostEstimate(
        flops=int(2 * B * Np * (Np * Hp + Hc * Hp + Hp * Hp)),
        transcendentals=0,
        bytes_accessed=int(B * Np * Np * tm_b + B * Np * Hc * cd_b + B * Np * Hp * 4
                           + (Hc + Hp) * Hp * cd_b + 2 * Hp * 4),
    )

    out = pl.pallas_call(
        kernel,
        out_shape=jax.ShapeDtypeStruct((B, Np, Hp), jnp.float32),
        grid_spec=pltpu.PrefetchScalarGridSpec(
            num_scalar_prefetch=0,
            grid=(B, n_m, n_k),                                   # K (reduction) axis last
            in_specs=[
                pl.BlockSpec((1, TM, TK), lambda b, m, k: (b, m, k)),   # tm tile
                pl.BlockSpec((1, Np, Hc), lambda b, m, k: (b, 0, 0)),   # xcat: resident per batch
                pl.BlockSpec((Hc, Hp), lambda b, m, k: (0, 0)),         # W1 (resident)
                pl.BlockSpec((1, Hp), lambda b, m, k: (0, 0)),          # b1
                pl.BlockSpec((Hp, Hp), lambda b, m, k: (0, 0)),         # W2
                pl.BlockSpec((1, Hp), lambda b, m, k: (0, 0)),          # b2
            ],
            out_specs=pl.BlockSpec((1, TM, Hp), lambda b, m, k: (b, m, 0)),
            scratch_shapes=[
                pltpu.VMEM((Np, Hp), cd),          # y for the current batch (never hits HBM)
                pltpu.VMEM((TM, Hp), jnp.float32),  # transport accumulator
            ],
        ),
        compiler_params=pltpu.CompilerParams(
            # batch is the only core-parallel axis: y scratch (computed at m==0,k==0) and the
            # f32 accumulator carry state across m / k, so those must stay on one core.
            dimension_semantics=("parallel", "arbitrary", "arbitrary"),
            vmem_limit_bytes=48 * 1024 * 1024),
        cost_estimate=cost,
    )(tm, xcat, w1_p, b1_p, w2_p, b2_p)

    return out[:, :N, :H]


def make_params(hidden_dim, key):
    """Deterministic synthetic weights for transport_net (stored as (in, out) = W.T)."""
    k1, k2, k3, k4 = jax.random.split(key, 4)
    H = hidden_dim
    w1 = jax.random.normal(k1, (2 * H, H), jnp.float32) * 0.05   # Linear(2H -> H)
    w1a, w1b = w1[:H], w1[H:]
    b1 = jax.random.normal(k2, (1, H), jnp.float32) * 0.05
    w2 = jax.random.normal(k3, (H, H), jnp.float32) * 0.05       # Linear(H -> H)
    b2 = jax.random.normal(k4, (1, H), jnp.float32) * 0.05
    return w1a, w1b, b1, w2, b2


def reference(source_feat, target_feat, transport_matrix, params):
    w1a, w1b, b1, w2, b2 = params
    x = jnp.concatenate([source_feat, target_feat], axis=-1)       # (B, N, 2H)
    w1 = jnp.concatenate([w1a, w1b], axis=0)                       # (2H, H)
    h = jax.nn.relu(x @ w1 + b1[0])
    y = h @ w2 + b2[0]
    return jnp.einsum("bmn,bnh->bmh", transport_matrix, y)


if __name__ == "__main__":
    B, N, H = 2, 8, 32          # batch, points, HIDDEN_DIM
    key = jax.random.PRNGKey(0)
    k_src, k_tgt, k_tm, k_par = jax.random.split(key, 4)

    source_feat = jax.random.normal(k_src, (B, N, H), jnp.float32)
    target_feat = jax.random.normal(k_tgt, (B, N, H), jnp.float32)
    # row-stochastic transport matrix, as produced by an OT solver
    transport_matrix = jax.nn.softmax(
        jax.random.normal(k_tm, (B, N, N), jnp.float32), axis=-1)

    params = make_params(H, k_par)
    ref = reference(source_feat, target_feat, transport_matrix, params)

    # f32 compute path (full per-batch blocks, no padding): tight check vs f32 reference.
    out_f32 = jax.block_until_ready(
        r2e_transport(source_feat, target_feat, transport_matrix, params,
                      compute_dtype=jnp.float32))
    assert out_f32.shape == (B, N, H)
    assert jnp.allclose(out_f32, ref, atol=2e-5, rtol=2e-5), "f32 mismatch vs reference"

    # bf16 MXU path (tm cast in-kernel, f32 accumulation): looser tolerance.
    out_bf16 = jax.block_until_ready(
        r2e_transport(source_feat, target_feat, transport_matrix, params,
                      compute_dtype=jnp.bfloat16))
    assert out_bf16.shape == (B, N, H)
    assert jnp.allclose(out_bf16, ref, atol=2e-2, rtol=2e-2), "bf16 mismatch vs reference"

    # Exercise the tiled / padded / chunked path at a small size (grid (B, 2, 2),
    # ragged N padded to 128-multiple, 2 MLP row-chunks, y reused across M/K tiles).
    N2 = 200
    ks2, kt2, km2 = jax.random.split(jax.random.PRNGKey(1), 3)
    src2 = jax.random.normal(ks2, (B, N2, H), jnp.float32)
    tgt2 = jax.random.normal(kt2, (B, N2, H), jnp.float32)
    tm2 = jax.nn.softmax(jax.random.normal(km2, (B, N2, N2), jnp.float32), axis=-1)
    ref2 = reference(src2, tgt2, tm2, params)
    out2 = jax.block_until_ready(
        r2e_transport(src2, tgt2, tm2, params, compute_dtype=jnp.float32,
                      max_full_n=0, block_m=128, block_k=128, mlp_chunk=128))
    assert out2.shape == (B, N2, H)
    assert jnp.allclose(out2, ref2, atol=1e-3, rtol=1e-3), "tiled-path mismatch vs reference"

    print("KERNEL_OK")
</pallas_src>

<mosaic_0001>
module attributes {stable_mosaic.version = 11 : i64} {
  func.func @kernel(%arg0: i32, %arg1: i32, %arg2: i32, %arg3: memref<1x8x8xf32, #tpu.memory_space<vmem>>, %arg4: memref<1x8x64xf32, #tpu.memory_space<vmem>>, %arg5: memref<64x128xf32, #tpu.memory_space<vmem>>, %arg6: memref<1x128xf32, #tpu.memory_space<vmem>>, %arg7: memref<128x128xf32, #tpu.memory_space<vmem>>, %arg8: memref<1x128xf32, #tpu.memory_space<vmem>>, %arg9: memref<1x8x128xf32, #tpu.memory_space<vmem>>, %arg10: memref<8x128xf32, #tpu.memory_space<vmem>>, %arg11: memref<8x128xf32, #tpu.memory_space<vmem>>) attributes {dimension_semantics = [#tpu.dimension_semantics<parallel>, #tpu.dimension_semantics<arbitrary>, #tpu.dimension_semantics<arbitrary>], iteration_bounds = array<i64: 2, 1, 1>, scalar_prefetch = 0 : i64, scratch_operands = 2 : i64, tpu.core_type = #tpu.core_type<tc>, window_params = [{transform_indices = @transform_0, window_bounds = array<i64: 1, 8, 8>}, {transform_indices = @transform_1, window_bounds = array<i64: 1, 8, 64>}, {pipeline_mode = #tpu.pipeline_mode<synchronous>, transform_indices = @transform_2, window_bounds = array<i64: 64, 128>}, {pipeline_mode = #tpu.pipeline_mode<synchronous>, transform_indices = @transform_3, window_bounds = array<i64: 1, 128>}, {pipeline_mode = #tpu.pipeline_mode<synchronous>, transform_indices = @transform_4, window_bounds = array<i64: 128, 128>}, {pipeline_mode = #tpu.pipeline_mode<synchronous>, transform_indices = @transform_5, window_bounds = array<i64: 1, 128>}, {transform_indices = @transform_6, window_bounds = array<i64: 1, 8, 128>}]} {
    %c0_i32 = arith.constant 0 : i32
    %0 = arith.cmpi eq, %arg1, %c0_i32 : i32
    %c0_i32_0 = arith.constant 0 : i32
    %1 = arith.cmpi eq, %arg2, %c0_i32_0 : i32
    %2 = arith.andi %0, %1 : i1
    %3 = arith.extui %2 : i1 to i32
    %c0_i32_1 = arith.constant 0 : i32
    %4 = arith.cmpi ne, %3, %c0_i32_1 : i32
    scf.if %4 {
      %c0_13 = arith.constant 0 : index
      %c0_14 = arith.constant 0 : index
      %c0_15 = arith.constant 0 : index
      %20 = vector.load %arg4[%c0_13, %c0_14, %c0_15] : memref<1x8x64xf32, #tpu.memory_space<vmem>>, vector<1x8x64xf32>
      %21 = vector.shape_cast %20 : vector<1x8x64xf32> to vector<8x64xf32>
      %c0_16 = arith.constant 0 : index
      %c0_17 = arith.constant 0 : index
      %22 = vector.load %arg5[%c0_16, %c0_17] : memref<64x128xf32, #tpu.memory_space<vmem>>, vector<64x128xf32>
      %cst_18 = arith.constant dense<0.000000e+00> : vector<8x128xf32>
      %23 = tpu.matmul %21, %22, %cst_18 {dimension_numbers = #tpu.dot_dimension_numbers<[1], [0], [0], [1], [0, 0, 1, 1], [], []>} : vector<8x64xf32>, vector<64x128xf32>, vector<8x128xf32> -> vector<8x128xf32>
      %c0_19 = arith.constant 0 : index
      %c0_20 = arith.constant 0 : index
      %24 = vector.load %arg6[%c0_19, %c0_20] : memref<1x128xf32, #tpu.memory_space<vmem>>, vector<1x128xf32>
      %25 = vector.broadcast %24 : vector<1x128xf32> to vector<8x128xf32>
      %26 = arith.addf %23, %25 : vector<8x128xf32>
      %cst_21 = arith.constant 0.000000e+00 : f32
      %27 = vector.broadcast %cst_21 : f32 to vector<8x128xf32>
      %28 = arith.maximumf %26, %27 : vector<8x128xf32>
      %c0_22 = arith.constant 0 : index
      %c0_23 = arith.constant 0 : index
      %29 = vector.load %arg7[%c0_22, %c0_23] : memref<128x128xf32, #tpu.memory_space<vmem>>, vector<128x128xf32>
      %cst_24 = arith.constant dense<0.000000e+00> : vector<8x128xf32>
      %30 = tpu.matmul %28, %29, %cst_24 {dimension_numbers = #tpu.dot_dimension_numbers<[1], [0], [0], [1], [0, 0, 1, 1], [], []>} : vector<8x128xf32>, vector<128x128xf32>, vector<8x128xf32> -> vector<8x128xf32>
      %c0_25 = arith.constant 0 : index
      %c0_26 = arith.constant 0 : index
      %31 = vector.load %arg8[%c0_25, %c0_26] : memref<1x128xf32, #tpu.memory_space<vmem>>, vector<1x128xf32>
      %32 = vector.broadcast %31 : vector<1x128xf32> to vector<8x128xf32>
      %33 = arith.addf %30, %32 : vector<8x128xf32>
      %c0_27 = arith.constant 0 : index
      %c0_28 = arith.constant 0 : index
      %34 = vector.load %arg10[%c0_27, %c0_28] : memref<8x128xf32, #tpu.memory_space<vmem>>, vector<8x128xf32>
      tpu.vector_store %arg10[%c0_27, %c0_28], %33 {strides = array<i32>} : memref<8x128xf32, #tpu.memory_space<vmem>>, vector<8x128xf32>,
    } else {
    }
    %c0_i32_2 = arith.constant 0 : i32
    %5 = arith.cmpi eq, %arg2, %c0_i32_2 : i32
    %6 = arith.extui %5 : i1 to i32
    %c0_i32_3 = arith.constant 0 : i32
    %7 = arith.cmpi ne, %6, %c0_i32_3 : i32
    scf.if %7 {
      %cst_13 = arith.constant 0.000000e+00 : f32
      %20 = vector.broadcast %cst_13 : f32 to vector<8x128xf32>
      %c0_14 = arith.constant 0 : index
      %c0_15 = arith.constant 0 : index
      %21 = vector.load %arg11[%c0_14, %c0_15] : memref<8x128xf32, #tpu.memory_space<vmem>>, vector<8x128xf32>
      tpu.vector_store %arg11[%c0_14, %c0_15], %20 {strides = array<i32>} : memref<8x128xf32, #tpu.memory_space<vmem>>, vector<8x128xf32>,
    } else {
    }
    %c0 = arith.constant 0 : index
    %c0_4 = arith.constant 0 : index
    %c0_5 = arith.constant 0 : index
    %8 = vector.load %arg3[%c0, %c0_4, %c0_5] : memref<1x8x8xf32, #tpu.memory_space<vmem>>, vector<1x8x8xf32>
    %9 = vector.shape_cast %8 : vector<1x8x8xf32> to vector<8x8xf32>
    %c8_i32 = arith.constant 8 : i32
    %10 = arith.muli %arg2, %c8_i32 : i32
    %11 = arith.index_cast %10 : i32 to index
    %c0_6 = arith.constant 0 : index
    %12 = vector.load %arg10[%11, %c0_6] : memref<8x128xf32, #tpu.memory_space<vmem>>, vector<8x128xf32>
    %c0_7 = arith.constant 0 : index
    %c0_8 = arith.constant 0 : index
    %13 = vector.load %arg11[%c0_7, %c0_8] : memref<8x128xf32, #tpu.memory_space<vmem>>, vector<8x128xf32>
    %cst = arith.constant dense<0.000000e+00> : vector<8x128xf32>
    %14 = tpu.matmul %9, %12, %cst {dimension_numbers = #tpu.dot_dimension_numbers<[1], [0], [0], [1], [0, 0, 1, 1], [], []>} : vector<8x8xf32>, vector<8x128xf32>, vector<8x128xf32> -> vector<8x128xf32>
    %15 = arith.addf %13, %14 : vector<8x128xf32>
    %c0_9 = arith.constant 0 : index
    %c0_10 = arith.constant 0 : index
    %16 = vector.load %arg11[%c0_9, %c0_10] : memref<8x128xf32, #tpu.memory_space<vmem>>, vector<8x128xf32>
    tpu.vector_store %arg11[%c0_9, %c0_10], %15 {strides = array<i32>} : memref<8x128xf32, #tpu.memory_space<vmem>>, vector<8x128xf32>,
    %c0_i32_11 = arith.constant 0 : i32
    %17 = arith.cmpi eq, %arg2, %c0_i32_11 : i32
    %18 = arith.extui %17 : i1 to i32
    %c0_i32_12 = arith.constant 0 : i32
    %19 = arith.cmpi ne, %18, %c0_i32_12 : i32
    scf.if %19 {
      %c0_13 = arith.constant 0 : index
      %c0_14 = arith.constant 0 : index
      %20 = vector.load %arg11[%c0_13, %c0_14] : memref<8x128xf32, #tpu.memory_space<vmem>>, vector<8x128xf32>
      %c0_15 = arith.constant 0 : index
      %c0_16 = arith.constant 0 : index
      %c0_17 = arith.constant 0 : index
      %21 = vector.load %arg9[%c0_15, %c0_16, %c0_17] : memref<1x8x128xf32, #tpu.memory_space<vmem>>, vector<1x8x128xf32>
      %22 = vector.shape_cast %21 : vector<1x8x128xf32> to vector<8x128xf32>
      %23 = vector.shape_cast %20 : vector<8x128xf32> to vector<1x8x128xf32>
      tpu.vector_store %arg9[%c0_15, %c0_16, %c0_17], %23 {strides = array<i32>} : memref<1x8x128xf32, #tpu.memory_space<vmem>>, vector<1x8x128xf32>,
    } else {
    }
    return
  }
  func.func @transform_0(%arg0: i32, %arg1: i32, %arg2: i32) -> (i32, i32, i32) {
    %c0_i32 = arith.constant 0 : i32
    return %arg0, %arg1, %arg2 : i32, i32, i32
  }
  func.func @transform_1(%arg0: i32, %arg1: i32, %arg2: i32) -> (i32, i32, i32) {
    %c0_i32 = arith.constant 0 : i32
    %c0_i32_0 = arith.constant 0 : i32
    %c0_i32_1 = arith.constant 0 : i32
    return %arg0, %c0_i32, %c0_i32_0 : i32, i32, i32
  }
  func.func @transform_2(%arg0: i32, %arg1: i32, %arg2: i32) -> (i32, i32) {
    %c0_i32 = arith.constant 0 : i32
    %c0_i32_0 = arith.constant 0 : i32
    %c0_i32_1 = arith.constant 0 : i32
    return %c0_i32, %c0_i32_0 : i32, i32
  }
  func.func @transform_3(%arg0: i32, %arg1: i32, %arg2: i32) -> (i32, i32) {
    %c0_i32 = arith.constant 0 : i32
    %c0_i32_0 = arith.constant 0 : i32
    %c0_i32_1 = arith.constant 0 : i32
    return %c0_i32, %c0_i32_0 : i32, i32
  }
  func.func @transform_4(%arg0: i32, %arg1: i32, %arg2: i32) -> (i32, i32) {
    %c0_i32 = arith.constant 0 : i32
    %c0_i32_0 = arith.constant 0 : i32
    %c0_i32_1 = arith.constant 0 : i32
    return %c0_i32, %c0_i32_0 : i32, i32
  }
  func.func @transform_5(%arg0: i32, %arg1: i32, %arg2: i32) -> (i32, i32) {
    %c0_i32 = arith.constant 0 : i32
    %c0_i32_0 = arith.constant 0 : i32
    %c0_i32_1 = arith.constant 0 : i32
    return %c0_i32, %c0_i32_0 : i32, i32
  }
  func.func @transform_6(%arg0: i32, %arg1: i32, %arg2: i32) -> (i32, i32, i32) {
    %c0_i32 = arith.constant 0 : i32
    %c0_i32_0 = arith.constant 0 : i32
    return %arg0, %arg1, %c0_i32 : i32, i32, i32
  }
}

</mosaic_0001>

<llo_original>
// kernel: tpu_custom_call.1
$region0: #{tpu_custom_call.1}
  #allocation0 [shape = 'u32[]', space=smem, size = 0x4, offset = 0x4, fixed_abs, tag = 'smem constant byte address 0x4 - core index']
  #allocation1 [shape = 'u32[144,128]{1,0:T(1,128)}', space=vmem, size = 0x12000, scoped, tag = 'internal scratch']
  #allocation2 [shape = 'f32[8,128]{1,0:T(8,128)}', space=vmem, size = 0x1000, scoped, tag = 'scratch operand']
  #allocation3 [shape = 'f32[8,128]{1,0:T(8,128)}', space=vmem, size = 0x1000, scoped, tag = 'scratch operand']
  %s0 = inlined_call_operand.hbm [shape: f32[2,8,8], index: 0, kind: input, shape index: {}]
  %s1 = inlined_call_operand.hbm [shape: f32[2,8,64], index: 1, kind: input, shape index: {}]
  %s2 = inlined_call_operand.hbm [shape: f32[64,128], index: 2, kind: input, shape index: {}]
  %s3 = inlined_call_operand.vmem [shape: f32[1,128], index: 3, kind: input, shape index: {}]
  %s4 = inlined_call_operand.hbm [shape: f32[128,128], index: 4, kind: input, shape index: {}]
  %s5 = inlined_call_operand.vmem [shape: f32[1,128], index: 5, kind: input, shape index: {}]
  %s6 = inlined_call_operand.hbm [shape: f32[2,8,128], index: 6, kind: output, shape index: {}]
  %s7 = sld [smem:[#allocation0]]
  $region85: #{tpu_custom_call.1} parent=0
    _
  %s9 = ssub.s32 1, %s7
  %s10 = scalar_select 0, %s9, %s7
  $region1: #{tpu_custom_call.1} parent=0
    #allocation4 [shape = 'u8[8192]{0}', space=vmem, size = 0x2000, scoped, tag = 'input window, operand 0']
    #allocation5 [shape = 's32[2]{0}', space=sflag, size = 0x8, scoped, tag = 'scoped memory for tpu_custom_call.1']
    #allocation6 [shape = 's32[2]{0}', space=sflag, size = 0x8, scoped, tag = 'scoped memory for tpu_custom_call.1']
    #allocation7 [shape = 'u8[8192]{0}', space=vmem, size = 0x2000, scoped, tag = 'input window, operand 1']
    #allocation8 [shape = 's32[2]{0}', space=sflag, size = 0x8, scoped, tag = 'scoped memory for tpu_custom_call.1']
    #allocation9 [shape = 'u8[32768]{0}', space=vmem, size = 0x8000, scoped, tag = 'input window, operand 2, single buffered']
    #allocation10 [shape = 'u8[65536]{0}', space=vmem, size = 0x10000, scoped, tag = 'input window, operand 4, single buffered']
    #allocation11 [shape = 's32[1]{0}', space=sflag, size = 0x4, scoped, tag = 'scoped memory for tpu_custom_call.1']
    #allocation12 [shape = 'u8[8192]{0}', space=vmem, size = 0x2000, scoped, tag = 'output window, operand 0']
    %11 = vsyncpa [#allocation5], 0
    %s12 = scalar_lea.sflag [#allocation5], 1
    %13 = vsyncpa %s12, 0
    %14 = vsyncpa [#allocation8], 0
    %s15 = scalar_lea.sflag [#allocation8], 1
    %16 = vsyncpa %s15, 0
    %17 = vsyncpa [#allocation11], 0
    %18 = vsyncpa [#allocation6], 0
    %s19 = scalar_lea.sflag [#allocation6], 1
    %20 = vsyncpa %s19, 0
    loop: start=0, step=1, limit=4
    $region2: #{tpu_custom_call.1} parent=1 // loop_pre_header
      _
    $region3: #{tpu_custom_call.1} parent=1 // loop_header
      %s22 = sphi 0, %s26
      %p23 = scmp.ge.s32.totalorder %s22, 4
      %s29 = sphi 0, %s48
      %s30 = sphi 0, %s44
      %s31 = sphi 0, %s40
      %s32 = sphi 0, %s29
      %s33 = sphi 0, %s30
      %s34 = sphi 0, %s31
      %s35 = sphi 0, %s32
      %s36 = sphi 0, %s33
      %s37 = sphi 0, %s34
      %s55 = sphi 0, %s57
      %s58 = sphi 0, %s55
      %s59 = sphi 0, %s58
      %s75 = sphi 0, %s59
      %s81 = sphi 0, %s83
      %s84 = sphi 0, %s81
      %s85 = sphi 0, %s84
      %s101 = sphi 0, %s85
      %s105 = sphi 0, %s105
      %s107 = sphi 0, %s105
      %s108 = sphi 0, %s107
      %s122 = sphi 0, %s108
      %s126 = sphi 0, %s126
      %s128 = sphi 0, %s126
      %s129 = sphi 0, %s128
      %s143 = sphi 0, %s129
      %s147 = sphi 0, %s147
      %s149 = sphi 0, %s147
      %s150 = sphi 0, %s149
      %s164 = sphi 0, %s150
      %s168 = sphi 0, %s168
      %s170 = sphi 0, %s168
      %s171 = sphi 0, %s170
      %s185 = sphi 0, %s171
      %s193 = sphi 0, %s195
      %s196 = sphi 0, %s193
      %s197 = sphi 0, %s196
      %s213 = sphi 0, %s197
    $region4: #{tpu_custom_call.1} parent=1 // loop_header_branch
      %25 = sbr.rel (%p23) target = $region8
    $region5: #{tpu_custom_call.1} parent=1 // loop_body
      %s27 = ssub.s32 %s22, 1
      %s28 = ssub.s32 %s22, 2
      %s38 = sadd.s32 1, %s31
      %p39 = scmp.ge.s32.totalorder %s38, 1
      %s40 = scalar_select %p39, 0, %s38
      %s41 = sadd.s32 1, %s30
      %s42 = scalar_select %p39, %s41, %s30
      %p43 = scmp.ge.s32.totalorder %s42, 1
      %s44 = scalar_select %p43, 0, %s42
      %s45 = sadd.s32 1, %s29
      %s46 = scalar_select %p43, %s45, %s29
      %p47 = scmp.ge.s32.totalorder %s46, 2
      %s48 = scalar_select %p47, 0, %s46
      %s49 = ssub.s32 %s29, %s48
      %s50 = ssub.s32 %s30, %s44
      %s51 = sor.u32 %s49, %s50
      %s52 = ssub.s32 %s31, %s40
      %s53 = sor.u32 %s51, %s52
      %p54 = scmp.eq.s32.totalorder %s53, 0
      %s56 = sadd.s32 %s55, 1
      %s57 = scalar_select %p54, %s55, %s56
      %p60 = pneg %p54
      %p61 = scmp.eq.s32.totalorder %s22, 1
      %p62 = por %p60, %p61
      %p63 = scmp.ne.s32.totalorder %s55, %s58
      %p64 = scmp.eq.s32.totalorder %s22, 0
      %p65 = por %p63, %p64
      %p66 = scmp.ne.s32.totalorder %s55, %s58
      %p67 = scmp.eq.s32.totalorder %s27, 1
      %p68 = por %p66, %p67
      %p69 = scmp.ne.s32.totalorder %s58, %s59
      %p70 = scmp.eq.s32.totalorder %s27, 0
      %p71 = por %p69, %p70
      %p72 = scmp.ne.s32.totalorder %s58, %s59
      %p73 = scmp.eq.s32.totalorder %s28, 1
      %p74 = por %p72, %p73
      %p76 = scmp.ne.s32.totalorder %s59, %s75
      %p77 = scmp.eq.s32.totalorder %s28, 0
      %p78 = por %p76, %p77
      %s79 = ssub.s32 %s29, %s48
      %p80 = scmp.eq.s32.totalorder %s79, 0
      %s82 = sadd.s32 %s81, 1
      %s83 = scalar_select %p80, %s81, %s82
      %p86 = pneg %p80
      %p87 = scmp.eq.s32.totalorder %s22, 1
      %p88 = por %p86, %p87
      %p89 = scmp.ne.s32.totalorder %s81, %s84
      %p90 = scmp.eq.s32.totalorder %s22, 0
      %p91 = por %p89, %p90
      %p92 = scmp.ne.s32.totalorder %s81, %s84
      %p93 = scmp.eq.s32.totalorder %s27, 1
      %p94 = por %p92, %p93
      %p95 = scmp.ne.s32.totalorder %s84, %s85
      %p96 = scmp.eq.s32.totalorder %s27, 0
      %p97 = por %p95, %p96
      %p98 = scmp.ne.s32.totalorder %s84, %s85
      %p99 = scmp.eq.s32.totalorder %s28, 1
      %p100 = por %p98, %p99
      %p102 = scmp.ne.s32.totalorder %s85, %s101
      %p103 = scmp.eq.s32.totalorder %s28, 0
      %p104 = por %p102, %p103
      %s106 = sadd.s32 %s105, 1
      %p109 = scmp.eq.s32.totalorder %s22, 1
      %p110 = scmp.ne.s32.totalorder %s105, %s107
      %p111 = scmp.eq.s32.totalorder %s22, 0
      %p112 = por %p110, %p111
      %p113 = scmp.ne.s32.totalorder %s105, %s107
      %p114 = scmp.eq.s32.totalorder %s27, 1
      %p115 = por %p113, %p114
      %p116 = scmp.ne.s32.totalorder %s107, %s108
      %p117 = scmp.eq.s32.totalorder %s27, 0
      %p118 = por %p116, %p117
      %p119 = scmp.ne.s32.totalorder %s107, %s108
      %p120 = scmp.eq.s32.totalorder %s28, 1
      %p121 = por %p119, %p120
      %p123 = scmp.ne.s32.totalorder %s108, %s122
      %p124 = scmp.eq.s32.totalorder %s28, 0
      %p125 = por %p123, %p124
      %s127 = sadd.s32 %s126, 1
      %p130 = scmp.eq.s32.totalorder %s22, 1
      %p131 = scmp.ne.s32.totalorder %s126, %s128
      %p132 = scmp.eq.s32.totalorder %s22, 0
      %p133 = por %p131, %p132
      %p134 = scmp.ne.s32.totalorder %s126, %s128
      %p135 = scmp.eq.s32.totalorder %s27, 1
      %p136 = por %p134, %p135
      %p137 = scmp.ne.s32.totalorder %s128, %s129
      %p138 = scmp.eq.s32.totalorder %s27, 0
      %p139 = por %p137, %p138
      %p140 = scmp.ne.s32.totalorder %s128, %s129
      %p141 = scmp.eq.s32.totalorder %s28, 1
      %p142 = por %p140, %p141
      %p144 = scmp.ne.s32.totalorder %s129, %s143
      %p145 = scmp.eq.s32.totalorder %s28, 0
      %p146 = por %p144, %p145
      %s148 = sadd.s32 %s147, 1
      %p151 = scmp.eq.s32.totalorder %s22, 1
      %p152 = scmp.ne.s32.totalorder %s147, %s149
      %p153 = scmp.eq.s32.totalorder %s22, 0
      %p154 = por %p152, %p153
      %p155 = scmp.ne.s32.totalorder %s147, %s149
      %p156 = scmp.eq.s32.totalorder %s27, 1
      %p157 = por %p155, %p156
      %p158 = scmp.ne.s32.totalorder %s149, %s150
      %p159 = scmp.eq.s32.totalorder %s27, 0
      %p160 = por %p158, %p159
      %p161 = scmp.ne.s32.totalorder %s149, %s150
      %p162 = scmp.eq.s32.totalorder %s28, 1
      %p163 = por %p161, %p162
      %p165 = scmp.ne.s32.totalorder %s150, %s164
      %p166 = scmp.eq.s32.totalorder %s28, 0
      %p167 = por %p165, %p166
      %s169 = sadd.s32 %s168, 1
      %p172 = scmp.eq.s32.totalorder %s22, 1
      %p173 = scmp.ne.s32.totalorder %s168, %s170
      %p174 = scmp.eq.s32.totalorder %s22, 0
      %p175 = por %p173, %p174
      %p176 = scmp.ne.s32.totalorder %s168, %s170
      %p177 = scmp.eq.s32.totalorder %s27, 1
      %p178 = por %p176, %p177
      %p179 = scmp.ne.s32.totalorder %s170, %s171
      %p180 = scmp.eq.s32.totalorder %s27, 0
      %p181 = por %p179, %p180
      %p182 = scmp.ne.s32.totalorder %s170, %s171
      %p183 = scmp.eq.s32.totalorder %s28, 1
      %p184 = por %p182, %p183
      %p186 = scmp.ne.s32.totalorder %s171, %s185
      %p187 = scmp.eq.s32.totalorder %s28, 0
      %p188 = por %p186, %p187
      %s189 = ssub.s32 %s29, %s48
      %s190 = ssub.s32 %s30, %s44
      %s191 = sor.u32 %s189, %s190
      %p192 = scmp.eq.s32.totalorder %s191, 0
      %s194 = sadd.s32 %s193, 1
      %s195 = scalar_select %p192, %s193, %s194
      %p198 = pneg %p192
      %p199 = scmp.eq.s32.totalorder %s22, 1
      %p200 = por %p198, %p199
      %p201 = scmp.ne.s32.totalorder %s193, %s196
      %p202 = scmp.eq.s32.totalorder %s22, 0
      %p203 = por %p201, %p202
      %p204 = scmp.ne.s32.totalorder %s193, %s196
      %p205 = scmp.eq.s32.totalorder %s27, 1
      %p206 = por %p204, %p205
      %p207 = scmp.ne.s32.totalorder %s196, %s197
      %p208 = scmp.eq.s32.totalorder %s27, 0
      %p209 = por %p207, %p208
      %p210 = scmp.ne.s32.totalorder %s196, %s197
      %p211 = scmp.eq.s32.totalorder %s28, 1
      %p212 = por %p210, %p211
      %p214 = scmp.ne.s32.totalorder %s197, %s213
      %p215 = scmp.eq.s32.totalorder %s28, 0
      %p216 = por %p214, %p215
      %p217 = scmp.le.s32.totalorder 1, %s22
      %p218 = scmp.lt.s32.totalorder %s22, 3
      %p219 = pnand %p217, %p218
      %p220 = pneg %p219
      // Predicated region
      $region9: #{tpu_custom_call.1} parent=5 // pred_check
        _
      $region10: #{tpu_custom_call.1} parent=5 // pred_check_branch
        %222 = sbr.rel (%p219) target = $region12
      $region11: #{tpu_custom_call.1} parent=5 // pred_region
        %s223 = ssub.s32 %s22, 1
        // Predicated region
        $region13: #{tpu_custom_call.1} parent=11 // pred_check
          %p224 = pneg %p118
        $region14: #{tpu_custom_call.1} parent=11 // pred_check_branch
          %226 = sbr.rel (%p224) target = $region16
        $region15: #{tpu_custom_call.1} parent=11 // pred_region
          %s228 = ssub.s32 1024, 1024
          %229 = vsyncadd [#allocation8], %s228
          %s230 = sshll.u32 [#allocation9], 4
          %s231 = int_to_ptr.vmem [resolvable:$true] %s230
          %236 = dma.hbm_to_vmem [thread:$0]  %s2, 1024, %s231, [#allocation8], 128, 128, 8
        $region16: #{tpu_custom_call.1} parent=11 // pred_fallthru
          _
        // Predicated region
        $region17: #{tpu_custom_call.1} parent=11 // pred_check
          %p237 = pneg %p139
        $region18: #{tpu_custom_call.1} parent=11 // pred_check_branch
          %239 = sbr.rel (%p237) target = $region20
        $region19: #{tpu_custom_call.1} parent=11 // pred_region
          _
        $region20: #{tpu_custom_call.1} parent=11 // pred_fallthru
          _
        // Predicated region
        $region21: #{tpu_custom_call.1} parent=11 // pred_check
          %p240 = pneg %p160
        $region22: #{tpu_custom_call.1} parent=11 // pred_check_branch
          %242 = sbr.rel (%p240) target = $region24
        $region23: #{tpu_custom_call.1} parent=11 // pred_region
          %s244 = ssub.s32 2048, 2048
          %245 = vsyncadd [#allocation11], %s244
          %s246 = sshll.u32 [#allocation10], 4
          %s247 = int_to_ptr.vmem [resolvable:$true] %s246
          %252 = dma.hbm_to_vmem [thread:$0]  %s4, 2048, %s247, [#allocation11], 128, 128, 8
        $region24: #{tpu_custom_call.1} parent=11 // pred_fallthru
          _
        // Predicated region
        $region25: #{tpu_custom_call.1} parent=11 // pred_check
          %p253 = pneg %p181
        $region26: #{tpu_custom_call.1} parent=11 // pred_check_branch
          %255 = sbr.rel (%p253) target = $region28
        $region27: #{tpu_custom_call.1} parent=11 // pred_region
          _
        $region28: #{tpu_custom_call.1} parent=11 // pred_fallthru
          _
      $region12: #{tpu_custom_call.1} parent=5 // pred_fallthru
        _
      %p256 = scmp.lt.s32.totalorder %s22, 2
      // Predicated region
      $region29: #{tpu_custom_call.1} parent=5 // pred_check
        %p257 = pneg %p256
      $region30: #{tpu_custom_call.1} parent=5 // pred_check_branch
        %259 = sbr.rel (%p257) target = $region32
      $region31: #{tpu_custom_call.1} parent=5 // pred_region
        // Predicated region
        $region33: #{tpu_custom_call.1} parent=31 // pred_check
          %p260 = pneg %p65
        $region34: #{tpu_custom_call.1} parent=31 // pred_check_branch
          %262 = sbr.rel (%p260) target = $region36
        $region35: #{tpu_custom_call.1} parent=31 // pred_region
          %s263 = sand.u32 %s55, 1
          %s264 = scalar_lea.sflag [#allocation5], %s263
          %s265 = sand.u32 %s55, 1
          %s266 = smul.addr %s265, 8
          %s267 = scalar_lea.vmem [#allocation4], %s266
          %s269 = ssub.s32 128, 128
          %270 = vsyncadd %s264, %s269
          %s271 = sadd.s32 %s31, %s30
          %s272 = sadd.s32 %s271, %s29
          %s273 = smul.addr %s272, 128
          %s274 = scalar_lea.hbm %s0, %s273
          %s276 = sshll.u32 %s267, 4
          %s277 = int_to_ptr.vmem [resolvable:$true] %s276
          %279 = dma.hbm_to_vmem [thread:$0]  %s274, 128, %s277, %s264
        $region36: #{tpu_custom_call.1} parent=31 // pred_fallthru
          _
        // Predicated region
        $region37: #{tpu_custom_call.1} parent=31 // pred_check
          %p280 = pneg %p91
        $region38: #{tpu_custom_call.1} parent=31 // pred_check_branch
          %282 = sbr.rel (%p280) target = $region40
        $region39: #{tpu_custom_call.1} parent=31 // pred_region
          %s283 = sand.u32 %s22, 1
          %s284 = scalar_lea.sflag [#allocation8], %s283
          %s285 = sand.u32 %s81, 1
          %s286 = smul.addr %s285, 8
          %s287 = scalar_lea.vmem [#allocation7], %s286
          %s289 = ssub.s32 128, 128
          %290 = vsyncadd %s284, %s289
          %s291 = smul.addr %s29, 128
          %s292 = scalar_lea.hbm %s1, %s291
          %s294 = sshll.u32 %s287, 4
          %s295 = int_to_ptr.vmem [resolvable:$true] %s294
          %297 = dma.hbm_to_vmem [thread:$0]  %s292, 128, %s295, %s284
        $region40: #{tpu_custom_call.1} parent=31 // pred_fallthru
          _
      $region32: #{tpu_custom_call.1} parent=5 // pred_fallthru
        _
      %p298 = scmp.le.s32.totalorder 1, %s22
      %p299 = scmp.lt.s32.totalorder %s22, 3
      %p300 = pnand %p298, %p299
      %p301 = pneg %p300
      // Predicated region
      $region41: #{tpu_custom_call.1} parent=5 // pred_check
        _
      $region42: #{tpu_custom_call.1} parent=5 // pred_check_branch
        %303 = sbr.rel (%p300) target = $region44
      $region43: #{tpu_custom_call.1} parent=5 // pred_region
        %s304 = ssub.s32 %s22, 1
        %s305 = sand.u32 %s58, 1
        %s306 = scalar_lea.sflag [#allocation5], %s305
        %s307 = sand.u32 %s58, 1
        %s308 = smul.addr %s307, 8
        %s309 = scalar_lea.vmem [#allocation4], %s308
        // Predicated region
        $region45: #{tpu_custom_call.1} parent=43 // pred_check
          %p310 = pneg %p71
        $region46: #{tpu_custom_call.1} parent=43 // pred_check_branch
          %312 = sbr.rel (%p310) target = $region48
        $region47: #{tpu_custom_call.1} parent=43 // pred_region
          %313 = dma.done %s306, 128
        $region48: #{tpu_custom_call.1} parent=43 // pred_fallthru
          _
        %s314 = sand.u32 %s27, 1
        %s315 = scalar_lea.sflag [#allocation8], %s314
        %s316 = sand.u32 %s84, 1
        %s317 = smul.addr %s316, 8
        %s318 = scalar_lea.vmem [#allocation7], %s317
        // Predicated region
        $region49: #{tpu_custom_call.1} parent=43 // pred_check
          %p319 = pneg %p97
        $region50: #{tpu_custom_call.1} parent=43 // pred_check_branch
          %321 = sbr.rel (%p319) target = $region52
        $region51: #{tpu_custom_call.1} parent=43 // pred_region
          %322 = dma.done %s315, 128
        $region52: #{tpu_custom_call.1} parent=43 // pred_fallthru
          _
        // Predicated region
        $region53: #{tpu_custom_call.1} parent=43 // pred_check
          %p323 = pneg %p118
        $region54: #{tpu_custom_call.1} parent=43 // pred_check_branch
          %325 = sbr.rel (%p323) target = $region56
        $region55: #{tpu_custom_call.1} parent=43 // pred_region
          %326 = dma.done [#allocation8], 1024
        $region56: #{tpu_custom_call.1} parent=43 // pred_fallthru
          _
        // Predicated region
        $region57: #{tpu_custom_call.1} parent=43 // pred_check
          %p327 = pneg %p160
        $region58: #{tpu_custom_call.1} parent=43 // pred_check_branch
          %329 = sbr.rel (%p327) target = $region60
        $region59: #{tpu_custom_call.1} parent=43 // pred_region
          %330 = dma.done [#allocation11], 2048
        $region60: #{tpu_custom_call.1} parent=43 // pred_fallthru
          _
        %s331 = sand.u32 %s58, 1
        %s332 = scalar_lea.sflag [#allocation5], %s331
        %s333 = sand.u32 %s58, 1
        %s334 = smul.addr %s333, 8
        %s335 = scalar_lea.vmem [#allocation4], %s334
        %p336 = pneg %p71
        %p337 = pneg %p68
        %s338 = sand.u32 %s27, 1
        %s339 = scalar_lea.sflag [#allocation8], %s338
        %s340 = sand.u32 %s84, 1
        %s341 = smul.addr %s340, 8
        %s342 = scalar_lea.vmem [#allocation7], %s341
        %p343 = pneg %p97
        %p344 = pneg %p94
        %p345 = pneg %p118
        %p346 = pneg %p115
        %p347 = pneg %p139
        %p348 = pneg %p136
        %p349 = pneg %p160
        %p350 = pneg %p157
        %p351 = pneg %p181
        %p352 = pneg %p178
        %p353 = pneg %p209
        %p354 = pneg %p206
        %s355 = sand.u32 %s196, 1
        %s356 = scalar_lea.sflag [#allocation6], %s355
        %s357 = sand.u32 %s196, 1
        %s358 = smul.addr %s357, 8
        %s359 = scalar_lea.vmem [#allocation12], %s358
        %p360 = scmp.eq.s32.totalorder %s33, 0
        %p361 = scmp.eq.s32.totalorder %s34, 0
        %p362 = pnand %p360, %p361
        %p363 = pneg %p362
        // Predicated region
        $region61: #{tpu_custom_call.1} parent=43 // pred_check
          _
        $region62: #{tpu_custom_call.1} parent=43 // pred_check_branch
          %365 = sbr.rel (%p362) target = $region64
        $region63: #{tpu_custom_call.1} parent=43 // pred_region
          %v366 = vld [vmem:[%s318] sm:$0xff]
          %v367 = vld [vmem:[#allocation9] sm:$0xff]
          %v368 = vld [vmem:[#allocation9 + $0x8] sm:$0xff]
          %v369 = vld [vmem:[#allocation9 + $0x10] sm:$0xff]
          %v370 = vld [vmem:[#allocation9 + $0x18] sm:$0xff]
          %v371 = vld [vmem:[#allocation9 + $0x20] sm:$0xff]
          %v372 = vld [vmem:[#allocation9 + $0x28] sm:$0xff]
          %v373 = vld [vmem:[#allocation9 + $0x30] sm:$0xff]
          %v374 = vld [vmem:[#allocation9 + $0x38] sm:$0xff]
          %v375 = vld [vmem:[%s3] sm:$0x1]
          %v377 = vlaneseq
          %v378 = vshrl.u32 %v377, 7
          %v379 = vsub.s32 0, %v378
          %v380 = vrot.slane %v375, %v379
          %vm382 = vcmask 523264
          %v384 = vsel %vm382, %v366, 0
          %386 = vmatprep.subr.mxu0 0.0
          %387 = vmatpush1.msra.mxu0 %v367
          %388 = vmatprep.subr.mxu0 0.0
          %389 = vmatpush1.msra.mxu0 %v368
          %390 = vmatprep.subr.mxu0 0.0
          %391 = vmatpush1.msra.mxu0 %v369
          %392 = vmatprep.subr.mxu0 0.0
          %393 = vmatpush1.msra.mxu0 %v370
          %394 = vmatprep.subr.mxu0 0.0
          %395 = vmatpush1.msra.mxu0 %v371
          %396 = vmatprep.subr.mxu0 0.0
          %397 = vmatpush1.msra.mxu0 %v372
          %398 = vmatprep.subr.mxu0 0.0
          %399 = vmatpush1.msra.mxu0 %v373
          %400 = vmatprep.subr.mxu0 0.0
          %401 = vmatpush1.msra.mxu0 %v374
          %402 = vmatprep.subr.mxu0 0.0
          %403 = vmatpush1.msra.mxu0 0.0
          %404 = vmatprep.subr.mxu0 0.0
          %405 = vmatpush1.msra.mxu0 0.0
          %406 = vmatprep.subr.mxu0 0.0
          %407 = vmatpush1.msra.mxu0 0.0
          %408 = vmatprep.subr.mxu0 0.0
          %409 = vmatpush1.msra.mxu0 0.0
          %410 = vmatprep.subr.mxu0 0.0
          %411 = vmatpush1.msra.mxu0 0.0
          %412 = vmatprep.subr.mxu0 0.0
          %413 = vmatpush1.msra.mxu0 0.0
          %414 = vmatprep.subr.mxu0 0.0
          %415 = vmatpush1.msra.mxu0 0.0
          %416 = vmatprep.subr.mxu0 0.0
          %417 = vmatpush1.msra.mxu0 0.0
          %418 = vmatprep.subr.mxu0 0.0
          %419 = vmatpush1.msra.mxu0 0.0
          %420 = vmatprep.subr.mxu0 0.0
          %421 = vmatpush1.msra.mxu0 0.0
          %422 = vmatprep.subr.mxu0 0.0
          %423 = vmatpush1.msra.mxu0 0.0
          %424 = vmatprep.subr.mxu0 0.0
          %425 = vmatpush1.msra.mxu0 0.0
          %426 = vmatprep.subr.mxu0 0.0
          %427 = vmatpush1.msra.mxu0 0.0
          %428 = vmatprep.subr.mxu0 0.0
          %429 = vmatpush1.msra.mxu0 0.0
          %430 = vmatprep.subr.mxu0 0.0
          %431 = vmatpush1.msra.mxu0 0.0
          %432 = vmatprep.subr.mxu0 0.0
          %433 = vmatpush1.msra.mxu0 0.0
          %434 = vmatprep.subr.mxu0 0.0
          %435 = vmatpush1.msra.mxu0 0.0
          %436 = vmatprep.subr.mxu0 0.0
          %437 = vmatpush1.msra.mxu0 0.0
          %438 = vmatprep.subr.mxu0 0.0
          %439 = vmatpush1.msra.mxu0 0.0
          %440 = vmatprep.subr.mxu0 0.0
          %441 = vmatpush1.msra.mxu0 0.0
          %442 = vmatprep.subr.mxu0 0.0
          %443 = vmatpush1.msra.mxu0 0.0
          %444 = vmatprep.subr.mxu0 0.0
          %445 = vmatpush1.msra.mxu0 0.0
          %446 = vmatprep.subr.mxu0 0.0
          %447 = vmatpush1.msra.mxu0 0.0
          %448 = vmatprep.subr.mxu0 0.0
          %449 = vmatpush1.msra.mxu0 0.0
          %450 = vmatprep.mubr.f32.mxu0 0.0
          %451 = vmatmul.mubr.f32.gmra.mrb[0].mxu0 %v384
          %v452 = vpop.f32.mrb[0].mxu0
          %v453 = vadd.f32 %v380, %v452
          %v454 = vpop.f32.mrb[0].mxu0
          %455 = vdwg.mxu0
          %v456 = vmax.f32 %v453, 0.0
          %v457 = vld [vmem:[#allocation10] sm:$0xff]
          %v458 = vld [vmem:[#allocation10 + $0x8] sm:$0xff]
          %v459 = vld [vmem:[#allocation10 + $0x10] sm:$0xff]
          %v460 = vld [vmem:[#allocation10 + $0x18] sm:$0xff]
          %v461 = vld [vmem:[#allocation10 + $0x20] sm:$0xff]
          %v462 = vld [vmem:[#allocation10 + $0x28] sm:$0xff]
          %v463 = vld [vmem:[#allocation10 + $0x30] sm:$0xff]
          %v464 = vld [vmem:[#allocation10 + $0x38] sm:$0xff]
          %v465 = vld [vmem:[#allocation10 + $0x40] sm:$0xff]
          %v466 = vld [vmem:[#allocation10 + $0x48] sm:$0xff]
          %v467 = vld [vmem:[#allocation10 + $0x50] sm:$0xff]
          %v468 = vld [vmem:[#allocation10 + $0x58] sm:$0xff]
          %v469 = vld [vmem:[#allocation10 + $0x60] sm:$0xff]
          %v470 = vld [vmem:[#allocation10 + $0x68] sm:$0xff]
          %v471 = vld [vmem:[#allocation10 + $0x70] sm:$0xff]
          %v472 = vld [vmem:[#allocation10 + $0x78] sm:$0xff]
          %v473 = vld [vmem:[%s5] sm:$0x1]
          %v475 = vlaneseq
          %v476 = vshrl.u32 %v475, 7
          %v477 = vsub.s32 0, %v476
          %v478 = vrot.slane %v473, %v477
          %480 = vmatprep.subr.mxu0 0.0
          %481 = vmatpush1.msra.mxu0 %v457
          %482 = vmatprep.subr.mxu0 0.0
          %483 = vmatpush1.msra.mxu0 %v458
          %484 = vmatprep.subr.mxu0 0.0
          %485 = vmatpush1.msra.mxu0 %v459
          %486 = vmatprep.subr.mxu0 0.0
          %487 = vmatpush1.msra.mxu0 %v460
          %488 = vmatprep.subr.mxu0 0.0
          %489 = vmatpush1.msra.mxu0 %v461
          %490 = vmatprep.subr.mxu0 0.0
          %491 = vmatpush1.msra.mxu0 %v462
          %492 = vmatprep.subr.mxu0 0.0
          %493 = vmatpush1.msra.mxu0 %v463
          %494 = vmatprep.subr.mxu0 0.0
          %495 = vmatpush1.msra.mxu0 %v464
          %496 = vmatprep.subr.mxu0 0.0
          %497 = vmatpush1.msra.mxu0 %v465
          %498 = vmatprep.subr.mxu0 0.0
          %499 = vmatpush1.msra.mxu0 %v466
          %500 = vmatprep.subr.mxu0 0.0
          %501 = vmatpush1.msra.mxu0 %v467
          %502 = vmatprep.subr.mxu0 0.0
          %503 = vmatpush1.msra.mxu0 %v468
          %504 = vmatprep.subr.mxu0 0.0
          %505 = vmatpush1.msra.mxu0 %v469
          %506 = vmatprep.subr.mxu0 0.0
          %507 = vmatpush1.msra.mxu0 %v470
          %508 = vmatprep.subr.mxu0 0.0
          %509 = vmatpush1.msra.mxu0 %v471
          %510 = vmatprep.subr.mxu0 0.0
          %511 = vmatpush1.msra.mxu0 %v472
          %512 = vmatprep.subr.mxu0 0.0
          %513 = vmatpush1.msra.mxu0 0.0
          %514 = vmatprep.subr.mxu0 0.0
          %515 = vmatpush1.msra.mxu0 0.0
          %516 = vmatprep.subr.mxu0 0.0
          %517 = vmatpush1.msra.mxu0 0.0
          %518 = vmatprep.subr.mxu0 0.0
          %519 = vmatpush1.msra.mxu0 0.0
          %520 = vmatprep.subr.mxu0 0.0
          %521 = vmatpush1.msra.mxu0 0.0
          %522 = vmatprep.subr.mxu0 0.0
          %523 = vmatpush1.msra.mxu0 0.0
          %524 = vmatprep.subr.mxu0 0.0
          %525 = vmatpush1.msra.mxu0 0.0
          %526 = vmatprep.subr.mxu0 0.0
          %527 = vmatpush1.msra.mxu0 0.0
          %528 = vmatprep.subr.mxu0 0.0
          %529 = vmatpush1.msra.mxu0 0.0
          %530 = vmatprep.subr.mxu0 0.0
          %531 = vmatpush1.msra.mxu0 0.0
          %532 = vmatprep.subr.mxu0 0.0
          %533 = vmatpush1.msra.mxu0 0.0
          %534 = vmatprep.subr.mxu0 0.0
          %535 = vmatpush1.msra.mxu0 0.0
          %536 = vmatprep.subr.mxu0 0.0
          %537 = vmatpush1.msra.mxu0 0.0
          %538 = vmatprep.subr.mxu0 0.0
          %539 = vmatpush1.msra.mxu0 0.0
          %540 = vmatprep.subr.mxu0 0.0
          %541 = vmatpush1.msra.mxu0 0.0
          %542 = vmatprep.subr.mxu0 0.0
          %543 = vmatpush1.msra.mxu0 0.0
          %544 = vmatprep.mubr.f32.mxu0 0.0
          %545 = vmatmul.mubr.f32.gmra.mrb[0].mxu0 %v456
          %v546 = vpop.f32.mrb[0].mxu0
          %v547 = vadd.f32 %v478, %v546
          %v548 = vpop.f32.mrb[0].mxu0
          %549 = vdwg.mxu0
          %550 = vst [vmem:[#allocation2] sm:$0xff] %v547
        $region64: #{tpu_custom_call.1} parent=43 // pred_fallthru
          _
        // Predicated region
        $region65: #{tpu_custom_call.1} parent=43 // pred_check
          %p551 = pneg %p361
        $region66: #{tpu_custom_call.1} parent=43 // pred_check_branch
          %553 = sbr.rel (%p551) target = $region68
        $region67: #{tpu_custom_call.1} parent=43 // pred_region
          %554 = vst [vmem:[#allocation3] sm:$0xff] 0.0
        $region68: #{tpu_custom_call.1} parent=43 // pred_fallthru
          _
        %v555 = vld [vmem:[%s309] sm:$0xff]
        %s556 = smul.u32 %s34, 8
        %s557 = scalar_lea.vmem [#allocation2], %s556
        %v558 = vld [vmem:[%s557] sm:$0xff]
        %v559 = vld [vmem:[#allocation3] sm:$0xff]
        %vm560 = vcmask 64512
        %v562 = vsel %vm560, %v555, 0
        %564 = vmatprep.subr.mxu0 0.0
        %565 = vmatpush1.msra.mxu0 %v558
        %566 = vmatprep.subr.mxu0 0.0
        %567 = vmatpush1.msra.mxu0 0.0
        %568 = vmatprep.subr.mxu0 0.0
        %569 = vmatpush1.msra.mxu0 0.0
        %570 = vmatprep.subr.mxu0 0.0
        %571 = vmatpush1.msra.mxu0 0.0
        %572 = vmatprep.subr.mxu0 0.0
        %573 = vmatpush1.msra.mxu0 0.0
        %574 = vmatprep.subr.mxu0 0.0
        %575 = vmatpush1.msra.mxu0 0.0
        %576 = vmatprep.subr.mxu0 0.0
        %577 = vmatpush1.msra.mxu0 0.0
        %578 = vmatprep.subr.mxu0 0.0
        %579 = vmatpush1.msra.mxu0 0.0
        %580 = vmatprep.subr.mxu0 0.0
        %581 = vmatpush1.msra.mxu0 0.0
        %582 = vmatprep.subr.mxu0 0.0
        %583 = vmatpush1.msra.mxu0 0.0
        %584 = vmatprep.subr.mxu0 0.0
        %585 = vmatpush1.msra.mxu0 0.0
        %586 = vmatprep.subr.mxu0 0.0
        %587 = vmatpush1.msra.mxu0 0.0
        %588 = vmatprep.subr.mxu0 0.0
        %589 = vmatpush1.msra.mxu0 0.0
        %590 = vmatprep.subr.mxu0 0.0
        %591 = vmatpush1.msra.mxu0 0.0
        %592 = vmatprep.subr.mxu0 0.0
        %593 = vmatpush1.msra.mxu0 0.0
        %594 = vmatprep.subr.mxu0 0.0
        %595 = vmatpush1.msra.mxu0 0.0
        %596 = vmatprep.subr.mxu0 0.0
        %597 = vmatpush1.msra.mxu0 0.0
        %598 = vmatprep.subr.mxu0 0.0
        %599 = vmatpush1.msra.mxu0 0.0
        %600 = vmatprep.subr.mxu0 0.0
        %601 = vmatpush1.msra.mxu0 0.0
        %602 = vmatprep.subr.mxu0 0.0
        %603 = vmatpush1.msra.mxu0 0.0
        %604 = vmatprep.subr.mxu0 0.0
        %605 = vmatpush1.msra.mxu0 0.0
        %606 = vmatprep.subr.mxu0 0.0
        %607 = vmatpush1.msra.mxu0 0.0
        %608 = vmatprep.subr.mxu0 0.0
        %609 = vmatpush1.msra.mxu0 0.0
        %610 = vmatprep.subr.mxu0 0.0
        %611 = vmatpush1.msra.mxu0 0.0
        %612 = vmatprep.subr.mxu0 0.0
        %613 = vmatpush1.msra.mxu0 0.0
        %614 = vmatprep.subr.mxu0 0.0
        %615 = vmatpush1.msra.mxu0 0.0
        %616 = vmatprep.subr.mxu0 0.0
        %617 = vmatpush1.msra.mxu0 0.0
        %618 = vmatprep.subr.mxu0 0.0
        %619 = vmatpush1.msra.mxu0 0.0
        %620 = vmatprep.subr.mxu0 0.0
        %621 = vmatpush1.msra.mxu0 0.0
        %622 = vmatprep.subr.mxu0 0.0
        %623 = vmatpush1.msra.mxu0 0.0
        %624 = vmatprep.subr.mxu0 0.0
        %625 = vmatpush1.msra.mxu0 0.0
        %626 = vmatprep.subr.mxu0 0.0
        %627 = vmatpush1.msra.mxu0 0.0
        %628 = vmatprep.mubr.f32.mxu0 0.0
        %629 = vmatmul.mubr.f32.gmra.mrb[0].mxu0 %v562
        %v630 = vpop.f32.mrb[0].mxu0
        %v631 = vadd.f32 0.0, %v630
        %v632 = vpop.f32.mrb[0].mxu0
        %633 = vdwg.mxu0
        %v634 = vadd.f32 %v559, %v631
        %635 = vst [vmem:[#allocation3] sm:$0xff] %v634
        // Predicated region
        $region69: #{tpu_custom_call.1} parent=43 // pred_check
          %p636 = pneg %p361
        $region70: #{tpu_custom_call.1} parent=43 // pred_check_branch
          %638 = sbr.rel (%p636) target = $region72
        $region71: #{tpu_custom_call.1} parent=43 // pred_region
          %v639 = vld [vmem:[#allocation3] sm:$0xff]
          %640 = vst [vmem:[%s359] sm:$0xff] %v639
        $region72: #{tpu_custom_call.1} parent=43 // pred_fallthru
          _
        %s641 = sand.u32 %s196, 1
        %s642 = scalar_lea.sflag [#allocation6], %s641
        %s643 = sand.u32 %s196, 1
        %s644 = smul.addr %s643, 8
        %s645 = scalar_lea.vmem [#allocation12], %s644
        // Predicated region
        $region73: #{tpu_custom_call.1} parent=43 // pred_check
          %p646 = pneg %p206
        $region74: #{tpu_custom_call.1} parent=43 // pred_check_branch
          %648 = sbr.rel (%p646) target = $region76
        $region75: #{tpu_custom_call.1} parent=43 // pred_region
          %s650 = ssub.s32 128, 128
          %651 = vsyncadd %s642, %s650
          %s652 = sadd.s32 %s33, %s32
          %s653 = smul.addr %s652, 128
          %s654 = scalar_lea.hbm %s6, %s653
          %s656 = sshll.u32 %s645, 4
          %s657 = int_to_ptr.vmem [resolvable:$true] %s656
          %659 = dma.vmem_to_hbm [thread:$0]  %s657, 128, %s654, %s642
        $region76: #{tpu_custom_call.1} parent=43 // pred_fallthru
          _
      $region44: #{tpu_custom_call.1} parent=5 // pred_fallthru
        _
      %p660 = scmp.le.s32.totalorder 2, %s22
      // Predicated region
      $region77: #{tpu_custom_call.1} parent=5 // pred_check
        %p661 = pneg %p660
      $region78: #{tpu_custom_call.1} parent=5 // pred_check_branch
        %663 = sbr.rel (%p661) target = $region80
      $region79: #{tpu_custom_call.1} parent=5 // pred_region
        %s664 = ssub.s32 %s22, 2
        // Predicated region
        $region81: #{tpu_custom_call.1} parent=79 // pred_check
          %p665 = pneg %p212
        $region82: #{tpu_custom_call.1} parent=79 // pred_check_branch
          %667 = sbr.rel (%p665) target = $region84
        $region83: #{tpu_custom_call.1} parent=79 // pred_region
          %s668 = sand.u32 %s197, 1
          %s669 = scalar_lea.sflag [#allocation6], %s668
          %s670 = sand.u32 %s197, 1
          %s671 = smul.addr %s670, 8
          %s672 = scalar_lea.vmem [#allocation12], %s671
          %673 = dma.done %s669, 128
        $region84: #{tpu_custom_call.1} parent=79 // pred_fallthru
          _
      $region80: #{tpu_custom_call.1} parent=5 // pred_fallthru
        _
    $region6: #{tpu_custom_call.1} parent=1 // loop_footer
      %s26 = sadd.s32 1, %s22
    $region7: #{tpu_custom_call.1} parent=1 // loop_footer_branch
      %21 = sbr.rel target = $region3
    $region8: #{tpu_custom_call.1} parent=1 // loop_exit
      _
    %674 = vsyncpa [#allocation5], 1
    %s675 = scalar_lea.sflag [#allocation5], 1
    %676 = vsyncpa %s675, 1
    %677 = vsyncpa [#allocation8], 1
    %s678 = scalar_lea.sflag [#allocation8], 1
    %679 = vsyncpa %s678, 1
    %680 = vsyncpa [#allocation11], 1
    %681 = vsyncpa [#allocation6], 1
    %s682 = scalar_lea.sflag [#allocation6], 1
    %683 = vsyncpa %s682, 1

</llo_original>
